<compile_context>
chip_gen: v7x
topology: tpu7x:2x2x1
jax: 0.10.0
libtpu: 0.0.40
codegen_flags: <defaults>
</compile_context>

<pallas_src>
import jax
import jax.numpy as jnp
import numpy as np
from jax import lax
from jax.experimental import pallas as pl
from jax.experimental.pallas import tpu as pltpu


def _log_sigmoid(x):
    # Numerically stable, single-exp/log1p form of log(sigmoid(x)) == F.logsigmoid.
    return jnp.minimum(x, 0.0) - jnp.log1p(jnp.exp(-jnp.abs(x)))


def _round_up(x, m):
    return ((x + m - 1) // m) * m


def _vmem_capacity_bytes():
    try:
        return int(pltpu.get_tpu_info().vmem_capacity_bytes)
    except Exception:
        return 64 * 1024 * 1024  # conservative (v7x) fallback


def _make_sgns_kernel(batch, tile_b, num_neg):
    B, TB, K = batch, tile_b, num_neg

    def kernel(t_idx, c_idx, n_idx,            # SMEM scalar-prefetch index refs
               in_tab, out_tab,                # VMEM-resident embedding tables
               out_ref,                        # (1, 1, 1) per-core partial sum
               tgt_buf, ctx_buf, negsum_buf,   # (TB, D) f32 gather buffers
               acc_ref):                       # (1, 1) f32 running-sum scratch
        core = pl.program_id(0)
        tile = pl.program_id(1)
        tiles_per_core = pl.num_programs(1)
        base = (core * tiles_per_core + tile) * TB

        @pl.when(tile == 0)
        def _():
            acc_ref[...] = jnp.zeros_like(acc_ref)

        # ---- fused embedding gather: in-VMEM dynamic row slices --------------
        @pl.loop(0, TB)
        def _(r):
            row = base + r

            @pl.when(row < B)                  # skip padded rows of ragged tiles
            def _():
                t = t_idx[row]
                c = c_idx[row]
                tgt_buf[pl.ds(r, 1), :] = in_tab[pl.ds(t, 1), :].astype(jnp.float32)
                ctx_buf[pl.ds(r, 1), :] = out_tab[pl.ds(c, 1), :].astype(jnp.float32)
                nsum = out_tab[pl.ds(n_idx[row * K], 1), :].astype(jnp.float32)
                for k in range(1, K):          # K static -> unrolled
                    nsum = nsum + out_tab[pl.ds(n_idx[row * K + k], 1), :].astype(jnp.float32)
                negsum_buf[pl.ds(r, 1), :] = nsum

        # ---- scores: VPU elementwise multiply + lane reduce -------------------
        tgt = tgt_buf[...]                                            # (TB, D)
        ctx = ctx_buf[...]                                            # (TB, D)
        pos_score = jnp.sum(ctx * tgt, axis=-1, keepdims=True)        # (TB, 1)
        # sum_k dot(-out_emb[neg_k], tgt) == -dot(sum_k out_emb[neg_k], tgt)
        neg_score = -jnp.sum(negsum_buf[...] * tgt, axis=-1, keepdims=True)

        per_ex = _log_sigmoid(pos_score) + _log_sigmoid(neg_score)    # (TB, 1)

        # Mask padded rows (uninitialized buffer garbage is killed by the select).
        rows = base + lax.broadcasted_iota(jnp.int32, (TB, 1), 0)
        per_ex = jnp.where(rows < B, per_ex, 0.0)

        acc_ref[...] += jnp.sum(per_ex, axis=0, keepdims=True)

        # ---- finalize: each core writes its own partial sum -------------------
        @pl.when(tile == tiles_per_core - 1)
        def _():
            out_ref[...] = acc_ref[...].reshape(1, 1, 1)

    return kernel


def sgns_forward(in_emb_w, out_emb_w, targets, contexts, negsamples,
                 num_negsample=3, tile_b=None):
    """Pure-function equivalent of sgns.forward (scalar f32 loss)."""
    in_emb_w = jnp.asarray(in_emb_w)       # native dtype; cast happens in-kernel
    out_emb_w = jnp.asarray(out_emb_w)
    targets = jnp.asarray(targets, jnp.int32).reshape(-1)
    contexts = jnp.asarray(contexts, jnp.int32).reshape(-1)
    negsamples = jnp.asarray(negsamples, jnp.int32).reshape(-1)

    B = int(targets.shape[0])
    D = int(in_emb_w.shape[1])
    K = int(num_negsample)

    if tile_b is None:
        tile_b = 4096                        # 3*TB*D*4 bytes of gather buffers
    TB = _round_up(max(8, min(int(tile_b), _round_up(B, 8))), 8)

    num_tiles = -(-B // TB)
    NC = 2 if num_tiles >= 2 else 1          # use both TCs on v7x; serial elsewhere
    tiles_per_core = -(-num_tiles // NC)
    b_pad = NC * tiles_per_core * TB
    pad = b_pad - B
    tgt_idx = jnp.pad(targets, (0, pad))     # padded rows skipped/masked in-kernel
    ctx_idx = jnp.pad(contexts, (0, pad))
    neg_idx = jnp.pad(negsamples, (0, pad * K))

    # ---- generation-aware VMEM budget ----------------------------------------
    vmem_cap = _vmem_capacity_bytes()
    table_bytes = (in_emb_w.size * in_emb_w.dtype.itemsize
                   + out_emb_w.size * out_emb_w.dtype.itemsize)
    scratch_bytes = 3 * TB * D * 4 + 8
    if table_bytes + scratch_bytes > int(0.6 * vmem_cap):
        # TODO(synk): add a double-buffered per-row HBM DMA-gather fallback for
        # vocabularies too large for VMEM residency.
        raise NotImplementedError("embedding tables too large for VMEM-resident SGNS kernel")
    vmem_limit = int(min(0.9 * vmem_cap,
                         max(32 * 1024 * 1024, table_bytes + scratch_bytes + (8 << 20))))

    kernel = _make_sgns_kernel(B, TB, K)

    grid_spec = pltpu.PrefetchScalarGridSpec(
        num_scalar_prefetch=3,
        grid=(NC, tiles_per_core),
        in_specs=[
            pl.BlockSpec(memory_space=pltpu.MemorySpace.VMEM),   # in_emb table, VMEM resident
            pl.BlockSpec(memory_space=pltpu.MemorySpace.VMEM),   # out_emb table, VMEM resident
        ],
        out_specs=pl.BlockSpec((1, 1, 1), lambda core, tile, ti, ci, ni: (core, 0, 0)),
        scratch_shapes=[
            pltpu.VMEM((TB, D), jnp.float32),    # gathered targets
            pltpu.VMEM((TB, D), jnp.float32),    # gathered contexts
            pltpu.VMEM((TB, D), jnp.float32),    # gathered K-sum of neg samples
            pltpu.VMEM((1, 1), jnp.float32),     # running-sum accumulator
        ],
    )

    cost = pl.CostEstimate(
        flops=2 * B * (2 + K) * D,
        transcendentals=4 * B,
        bytes_accessed=int(table_bytes + 4 * B * (2 + K) + 4 * NC),
    )

    partials = pl.pallas_call(
        kernel,
        out_shape=jax.ShapeDtypeStruct((NC, 1, 1), jnp.float32),
        grid_spec=grid_spec,
        compiler_params=pltpu.CompilerParams(
            dimension_semantics=("parallel", "arbitrary"),
            vmem_limit_bytes=vmem_limit,
        ),
        cost_estimate=cost,
    )(tgt_idx, ctx_idx, neg_idx, in_emb_w, out_emb_w)

    return -(jnp.sum(partials) / jnp.float32(B))


def _reference_loss(in_emb_w, out_emb_w, targets, contexts, negsamples, num_negsample=3):
    # Pure-JAX reference mirroring the PyTorch forward exactly.
    B = targets.shape[0]
    D = in_emb_w.shape[1]
    tgt = in_emb_w[targets][:, None, :]                               # (B, 1, D)
    ctx = out_emb_w[contexts][:, None, :]                             # (B, 1, D)
    neg = -out_emb_w[negsamples].reshape(B, num_negsample, D)         # (B, K, D)
    pos = jnp.einsum('bid,bjd->bi', ctx, tgt)                         # (B, 1)
    negs = jnp.einsum('bkd,bjd->bk', neg, tgt)                        # (B, K)
    negs = jnp.sum(negs, axis=1, keepdims=True)                       # (B, 1)
    loss = _log_sigmoid(pos) + _log_sigmoid(negs)
    return -jnp.mean(loss)


if __name__ == "__main__":
    key = jax.random.PRNGKey(0)
    keys = jax.random.split(key, 8)

    num_words, num_docs, embedding_dim = 50, 10, 32
    num_negsample = 3
    init_range = 0.005

    # in_emb ~ U(-0.005, 0.005) as in the module; out_emb is zero-initialized in
    # the module, but small random values are used here so the compute path is
    # exercised non-trivially.
    in_emb_w = jax.random.uniform(
        keys[0], (num_words + num_docs, embedding_dim),
        minval=-init_range, maxval=init_range, dtype=jnp.float32)
    out_emb_w = jax.random.uniform(
        keys[1], (num_words, embedding_dim),
        minval=-init_range, maxval=init_range, dtype=jnp.float32)

    # -- small, module-scale batch --------------------------------------------
    B1 = 8
    t1 = jax.random.randint(keys[2], (B1,), 0, num_words + num_docs, dtype=jnp.int32)
    c1 = jax.random.randint(keys[3], (B1,), 0, num_words, dtype=jnp.int32)
    n1 = jax.random.randint(keys[4], (B1 * num_negsample,), 0, num_words, dtype=jnp.int32)
    loss1 = jax.block_until_ready(
        sgns_forward(in_emb_w, out_emb_w, t1, c1, n1, num_negsample))
    ref1 = jax.block_until_ready(
        _reference_loss(in_emb_w, out_emb_w, t1, c1, n1, num_negsample))
    assert np.allclose(np.asarray(loss1), np.asarray(ref1), rtol=1e-4, atol=1e-5), (loss1, ref1)

    # -- larger batch: exercises multi-tile accumulation, the 2-core grid split
    #    and ragged-tile masking ----------------------------------------------
    B2 = 600
    t2 = jax.random.randint(keys[5], (B2,), 0, num_words + num_docs, dtype=jnp.int32)
    c2 = jax.random.randint(keys[6], (B2,), 0, num_words, dtype=jnp.int32)
    n2 = jax.random.randint(keys[7], (B2 * num_negsample,), 0, num_words, dtype=jnp.int32)
    loss2 = jax.block_until_ready(
        sgns_forward(in_emb_w, out_emb_w, t2, c2, n2, num_negsample, tile_b=128))
    ref2 = jax.block_until_ready(
        _reference_loss(in_emb_w, out_emb_w, t2, c2, n2, num_negsample))
    assert np.allclose(np.asarray(loss2), np.asarray(ref2), rtol=1e-4, atol=1e-5), (loss2, ref2)

    print("KERNEL_OK")
</pallas_src>

<mosaic_0001>
module attributes {stable_mosaic.version = 11 : i64} {
  func.func @kernel(%arg0: i32, %arg1: i32, %arg2: memref<8xi32, #tpu.memory_space<smem>>, %arg3: memref<8xi32, #tpu.memory_space<smem>>, %arg4: memref<24xi32, #tpu.memory_space<smem>>, %arg5: memref<60x32xf32, #tpu.memory_space<vmem>>, %arg6: memref<50x32xf32, #tpu.memory_space<vmem>>, %arg7: memref<1x1x1xf32, #tpu.memory_space<vmem>>, %arg8: memref<8x32xf32, #tpu.memory_space<vmem>>, %arg9: memref<8x32xf32, #tpu.memory_space<vmem>>, %arg10: memref<8x32xf32, #tpu.memory_space<vmem>>, %arg11: memref<1x1xf32, #tpu.memory_space<vmem>>) attributes {dimension_semantics = [#tpu.dimension_semantics<parallel>, #tpu.dimension_semantics<arbitrary>], iteration_bounds = array<i64: 1, 1>, scalar_prefetch = 3 : i64, scratch_operands = 4 : i64, tpu.core_type = #tpu.core_type<tc>, window_params = [{pipeline_mode = #tpu.pipeline_mode<synchronous>, transform_indices = @transform_0, window_bounds = array<i64: 60, 32>}, {pipeline_mode = #tpu.pipeline_mode<synchronous>, transform_indices = @transform_1, window_bounds = array<i64: 50, 32>}, {transform_indices = @transform_2, window_bounds = array<i64: 1, 1, 1>}]} {
    %c1_i32 = arith.constant 1 : i32
    %0 = arith.muli %arg0, %c1_i32 : i32
    %1 = arith.addi %0, %arg1 : i32
    %c8_i32 = arith.constant 8 : i32
    %2 = arith.muli %1, %c8_i32 : i32
    %c0_i32 = arith.constant 0 : i32
    %3 = arith.cmpi eq, %arg1, %c0_i32 : i32
    %4 = arith.extui %3 : i1 to i32
    %c0_i32_0 = arith.constant 0 : i32
    %5 = arith.cmpi ne, %4, %c0_i32_0 : i32
    scf.if %5 {
      %cst_25 = arith.constant 0.000000e+00 : f32
      %50 = vector.broadcast %cst_25 : f32 to vector<1x1xf32>
      %c0_26 = arith.constant 0 : index
      %c0_27 = arith.constant 0 : index
      %51 = vector.load %arg11[%c0_26, %c0_27] : memref<1x1xf32, #tpu.memory_space<vmem>>, vector<1x1xf32>
      tpu.vector_store %arg11[%c0_26, %c0_27], %50 {strides = array<i32>} : memref<1x1xf32, #tpu.memory_space<vmem>>, vector<1x1xf32>,
    } else {
    }
    %c0_i32_1 = arith.constant 0 : i32
    %c8_i32_2 = arith.constant 8 : i32
    %6 = arith.addi %c0_i32_1, %c8_i32_2 : i32
    %c1_i32_3 = arith.constant 1 : i32
    scf.for %arg12 = %c0_i32_1 to %6 step %c1_i32_3  : i32 {
      %c1_i32_25 = arith.constant 1 : i32
      %50 = arith.muli %arg12, %c1_i32_25 : i32
      %c0_i32_26 = arith.constant 0 : i32
      %51 = arith.addi %c0_i32_26, %50 : i32
      %52 = arith.addi %2, %51 : i32
      %c8_i32_27 = arith.constant 8 : i32
      %53 = arith.cmpi slt, %52, %c8_i32_27 : i32
      %54 = arith.extui %53 : i1 to i32
      %c0_i32_28 = arith.constant 0 : i32
      %55 = arith.cmpi ne, %54, %c0_i32_28 : i32
      scf.if %55 {
        %56 = arith.index_cast %52 : i32 to index
        %57 = memref.load %arg2[%56] : memref<8xi32, #tpu.memory_space<smem>>
        %58 = arith.index_cast %52 : i32 to index
        %59 = memref.load %arg3[%58] : memref<8xi32, #tpu.memory_space<smem>>
        %60 = arith.index_cast %57 : i32 to index
        %c0_29 = arith.constant 0 : index
        %61 = vector.load %arg5[%60, %c0_29] : memref<60x32xf32, #tpu.memory_space<vmem>>, vector<1x32xf32>
        %62 = arith.index_cast %51 : i32 to index
        %c0_30 = arith.constant 0 : index
        %63 = vector.load %arg8[%62, %c0_30] : memref<8x32xf32, #tpu.memory_space<vmem>>, vector<1x32xf32>
        tpu.vector_store %arg8[%62, %c0_30], %61 {strides = array<i32>} : memref<8x32xf32, #tpu.memory_space<vmem>>, vector<1x32xf32>,
        %64 = arith.index_cast %59 : i32 to index
        %c0_31 = arith.constant 0 : index
        %65 = vector.load %arg6[%64, %c0_31] : memref<50x32xf32, #tpu.memory_space<vmem>>, vector<1x32xf32>
        %66 = arith.index_cast %51 : i32 to index
        %c0_32 = arith.constant 0 : index
        %67 = vector.load %arg9[%66, %c0_32] : memref<8x32xf32, #tpu.memory_space<vmem>>, vector<1x32xf32>
        tpu.vector_store %arg9[%66, %c0_32], %65 {strides = array<i32>} : memref<8x32xf32, #tpu.memory_space<vmem>>, vector<1x32xf32>,
        %c3_i32 = arith.constant 3 : i32
        %68 = arith.muli %52, %c3_i32 : i32
        %69 = arith.index_cast %68 : i32 to index
        %70 = memref.load %arg4[%69] : memref<24xi32, #tpu.memory_space<smem>>
        %71 = arith.index_cast %70 : i32 to index
        %c0_33 = arith.constant 0 : index
        %72 = vector.load %arg6[%71, %c0_33] : memref<50x32xf32, #tpu.memory_space<vmem>>, vector<1x32xf32>
        %c3_i32_34 = arith.constant 3 : i32
        %73 = arith.muli %52, %c3_i32_34 : i32
        %c1_i32_35 = arith.constant 1 : i32
        %74 = arith.addi %73, %c1_i32_35 : i32
        %75 = arith.index_cast %74 : i32 to index
        %76 = memref.load %arg4[%75] : memref<24xi32, #tpu.memory_space<smem>>
        %77 = arith.index_cast %76 : i32 to index
        %c0_36 = arith.constant 0 : index
        %78 = vector.load %arg6[%77, %c0_36] : memref<50x32xf32, #tpu.memory_space<vmem>>, vector<1x32xf32>
        %79 = arith.addf %72, %78 : vector<1x32xf32>
        %c3_i32_37 = arith.constant 3 : i32
        %80 = arith.muli %52, %c3_i32_37 : i32
        %c2_i32 = arith.constant 2 : i32
        %81 = arith.addi %80, %c2_i32 : i32
        %82 = arith.index_cast %81 : i32 to index
        %83 = memref.load %arg4[%82] : memref<24xi32, #tpu.memory_space<smem>>
        %84 = arith.index_cast %83 : i32 to index
        %c0_38 = arith.constant 0 : index
        %85 = vector.load %arg6[%84, %c0_38] : memref<50x32xf32, #tpu.memory_space<vmem>>, vector<1x32xf32>
        %86 = arith.addf %79, %85 : vector<1x32xf32>
        %87 = arith.index_cast %51 : i32 to index
        %c0_39 = arith.constant 0 : index
        %88 = vector.load %arg10[%87, %c0_39] : memref<8x32xf32, #tpu.memory_space<vmem>>, vector<1x32xf32>
        tpu.vector_store %arg10[%87, %c0_39], %86 {strides = array<i32>} : memref<8x32xf32, #tpu.memory_space<vmem>>, vector<1x32xf32>,
      } else {
      }
    }
    %c8_i32_4 = arith.constant 8 : i32
    %c0 = arith.constant 0 : index
    %c0_5 = arith.constant 0 : index
    %7 = vector.load %arg8[%c0, %c0_5] : memref<8x32xf32, #tpu.memory_space<vmem>>, vector<8x32xf32>
    %c0_6 = arith.constant 0 : index
    %c0_7 = arith.constant 0 : index
    %8 = vector.load %arg9[%c0_6, %c0_7] : memref<8x32xf32, #tpu.memory_space<vmem>>, vector<8x32xf32>
    %9 = arith.mulf %8, %7 : vector<8x32xf32>
    %cst = arith.constant dense<0.000000e+00> : vector<8xf32>
    %10 = vector.multi_reduction <add>, %9, %cst [1] : vector<8x32xf32> to vector<8xf32>
    %11 = vector.shape_cast %10 : vector<8xf32> to vector<8x1xf32>
    %c0_8 = arith.constant 0 : index
    %c0_9 = arith.constant 0 : index
    %12 = vector.load %arg10[%c0_8, %c0_9] : memref<8x32xf32, #tpu.memory_space<vmem>>, vector<8x32xf32>
    %13 = arith.mulf %12, %7 : vector<8x32xf32>
    %cst_10 = arith.constant dense<0.000000e+00> : vector<8xf32>
    %14 = vector.multi_reduction <add>, %13, %cst_10 [1] : vector<8x32xf32> to vector<8xf32>
    %15 = vector.shape_cast %14 : vector<8xf32> to vector<8x1xf32>
    %cst_11 = arith.constant 0.000000e+00 : f32
    %16 = vector.broadcast %cst_11 : f32 to vector<8x1xf32>
    %17 = arith.subf %16, %15 : vector<8x1xf32>
    %cst_12 = arith.constant 0.000000e+00 : f32
    %18 = vector.broadcast %cst_12 : f32 to vector<8x1xf32>
    %19 = arith.minimumf %11, %18 : vector<8x1xf32>
    %20 = math.absf %11 : vector<8x1xf32>
    %cst_13 = arith.constant 0.000000e+00 : f32
    %21 = vector.broadcast %cst_13 : f32 to vector<8x1xf32>
    %22 = arith.subf %21, %20 : vector<8x1xf32>
    %23 = math.exp %22 : vector<8x1xf32>
    %24 = math.log1p %23 : vector<8x1xf32>
    %25 = arith.subf %19, %24 : vector<8x1xf32>
    %cst_14 = arith.constant 0.000000e+00 : f32
    %26 = vector.broadcast %cst_14 : f32 to vector<8x1xf32>
    %27 = arith.minimumf %17, %26 : vector<8x1xf32>
    %28 = math.absf %17 : vector<8x1xf32>
    %cst_15 = arith.constant 0.000000e+00 : f32
    %29 = vector.broadcast %cst_15 : f32 to vector<8x1xf32>
    %30 = arith.subf %29, %28 : vector<8x1xf32>
    %31 = math.exp %30 : vector<8x1xf32>
    %32 = math.log1p %31 : vector<8x1xf32>
    %33 = arith.subf %27, %32 : vector<8x1xf32>
    %34 = arith.addf %25, %33 : vector<8x1xf32>
    %35 = tpu.iota {dimensions = array<i32: 0>} : vector<8x1xi32>
    %36 = vector.broadcast %2 : i32 to vector<8x1xi32>
    %37 = arith.addi %36, %35 : vector<8x1xi32>
    %c8_i32_16 = arith.constant 8 : i32
    %38 = vector.broadcast %c8_i32_16 : i32 to vector<8x1xi32>
    %39 = arith.cmpi slt, %37, %38 : vector<8x1xi32>
    %cst_17 = arith.constant 0.000000e+00 : f32
    %40 = vector.broadcast %cst_17 : f32 to vector<8x1xf32>
    %41 = arith.select %39, %34, %40 : vector<8x1xi1>, vector<8x1xf32>
    %c0_18 = arith.constant 0 : index
    %c0_19 = arith.constant 0 : index
    %42 = vector.load %arg11[%c0_18, %c0_19] : memref<1x1xf32, #tpu.memory_space<vmem>>, vector<1x1xf32>
    %cst_20 = arith.constant dense<0.000000e+00> : vector<1xf32>
    %43 = vector.multi_reduction <add>, %41, %cst_20 [0] : vector<8x1xf32> to vector<1xf32>
    %44 = vector.shape_cast %43 : vector<1xf32> to vector<1x1xf32>
    %45 = arith.addf %42, %44 : vector<1x1xf32>
    %c0_21 = arith.constant 0 : index
    %c0_22 = arith.constant 0 : index
    %46 = vector.load %arg11[%c0_21, %c0_22] : memref<1x1xf32, #tpu.memory_space<vmem>>, vector<1x1xf32>
    tpu.vector_store %arg11[%c0_21, %c0_22], %45 {strides = array<i32>} : memref<1x1xf32, #tpu.memory_space<vmem>>, vector<1x1xf32>,
    %c0_i32_23 = arith.constant 0 : i32
    %47 = arith.cmpi eq, %arg1, %c0_i32_23 : i32
    %48 = arith.extui %47 : i1 to i32
    %c0_i32_24 = arith.constant 0 : i32
    %49 = arith.cmpi ne, %48, %c0_i32_24 : i32
    scf.if %49 {
      %c0_25 = arith.constant 0 : index
      %c0_26 = arith.constant 0 : index
      %50 = vector.load %arg11[%c0_25, %c0_26] : memref<1x1xf32, #tpu.memory_space<vmem>>, vector<1x1xf32>
      %51 = vector.shape_cast %50 : vector<1x1xf32> to vector<1x1x1xf32>
      %c0_27 = arith.constant 0 : index
      %c0_28 = arith.constant 0 : index
      %c0_29 = arith.constant 0 : index
      %52 = vector.load %arg7[%c0_27, %c0_28, %c0_29] : memref<1x1x1xf32, #tpu.memory_space<vmem>>, vector<1x1x1xf32>
      tpu.vector_store %arg7[%c0_27, %c0_28, %c0_29], %51 {strides = array<i32>} : memref<1x1x1xf32, #tpu.memory_space<vmem>>, vector<1x1x1xf32>,
    } else {
    }
    return
  }
  func.func @transform_0(%arg0: i32, %arg1: i32, %arg2: memref<8xi32, #tpu.memory_space<smem>>, %arg3: memref<8xi32, #tpu.memory_space<smem>>, %arg4: memref<24xi32, #tpu.memory_space<smem>>) -> (i32, i32) {
    %c0_i32 = arith.constant 0 : i32
    %c0_i32_0 = arith.constant 0 : i32
    %c0_i32_1 = arith.constant 0 : i32
    return %c0_i32, %c0_i32_0 : i32, i32
  }
  func.func @transform_1(%arg0: i32, %arg1: i32, %arg2: memref<8xi32, #tpu.memory_space<smem>>, %arg3: memref<8xi32, #tpu.memory_space<smem>>, %arg4: memref<24xi32, #tpu.memory_space<smem>>) -> (i32, i32) {
    %c0_i32 = arith.constant 0 : i32
    %c0_i32_0 = arith.constant 0 : i32
    %c0_i32_1 = arith.constant 0 : i32
    return %c0_i32, %c0_i32_0 : i32, i32
  }
  func.func @transform_2(%arg0: i32, %arg1: i32, %arg2: memref<8xi32, #tpu.memory_space<smem>>, %arg3: memref<8xi32, #tpu.memory_space<smem>>, %arg4: memref<24xi32, #tpu.memory_space<smem>>) -> (i32, i32, i32) {
    %c0_i32 = arith.constant 0 : i32
    %c0_i32_0 = arith.constant 0 : i32
    %c0_i32_1 = arith.constant 0 : i32
    return %arg0, %c0_i32, %c0_i32_0 : i32, i32, i32
  }
}

</mosaic_0001>

<llo_original>
// kernel: tpu_custom_call.1
$region0: #{tpu_custom_call.1}
  #allocation0 [shape = 'u32[]', space=smem, size = 0x4, offset = 0x4, fixed_abs, tag = 'smem constant byte address 0x4 - core index']
  #allocation1 [shape = 'u32[144,128]{1,0:T(1,128)}', space=vmem, size = 0x12000, scoped, tag = 'internal scratch']
  #allocation2 [shape = 'f32[8,32]{1,0:T(8,128)}', space=vmem, size = 0x1000, scoped, tag = 'scratch operand']
  #allocation3 [shape = 'f32[8,32]{1,0:T(8,128)}', space=vmem, size = 0x1000, scoped, tag = 'scratch operand']
  #allocation4 [shape = 'f32[8,32]{1,0:T(8,128)}', space=vmem, size = 0x1000, scoped, tag = 'scratch operand']
  #allocation5 [shape = 'f32[1,1]{1,0:T(1,128)}', space=vmem, size = 0x200, scoped, tag = 'scratch operand']
  #allocation6 [shape = 's32[1]{0}', space=sflag, size = 0x4, scoped, tag = 'scoped memory for tpu_custom_call.1']
  #allocation7 [shape = 'u8[512]{0}', space=smem, size = 0x200, scoped, tag = 'prefetched SMEM operand 0']
  #allocation8 [shape = 'u8[512]{0}', space=smem, size = 0x200, scoped, tag = 'prefetched SMEM operand 1']
  #allocation9 [shape = 'u8[512]{0}', space=smem, size = 0x200, scoped, tag = 'prefetched SMEM operand 2']
  %s0 = inlined_call_operand.vmem [shape: s32[8], index: 0, kind: input, shape index: {}]
  %s1 = inlined_call_operand.vmem [shape: s32[8], index: 1, kind: input, shape index: {}]
  %s2 = inlined_call_operand.vmem [shape: s32[24], index: 2, kind: input, shape index: {}]
  %s3 = inlined_call_operand.vmem [shape: f32[60,32], index: 3, kind: input, shape index: {}]
  %s4 = inlined_call_operand.vmem [shape: f32[50,32], index: 4, kind: input, shape index: {}]
  %s5 = inlined_call_operand.hbm [shape: f32[1,1,1], index: 5, kind: output, shape index: {}]
  %s6 = sld [smem:[#allocation0]]
  $region37: #{tpu_custom_call.1} parent=0
    _
  %s8 = ssub.s32 1, %s6
  %s9 = scalar_select 0, %s8, %s6
  %s10 = sshll.u32 %s0, 4
  %s11 = int_to_ptr.vmem [resolvable:$true] %s10
  %13 = dma.vmem_to_smem %s11, 16, [#allocation7], [#allocation6]
  %s14 = sshll.u32 %s1, 4
  %s15 = int_to_ptr.vmem [resolvable:$true] %s14
  %17 = dma.vmem_to_smem %s15, 16, [#allocation8], [#allocation6]
  %s18 = sshll.u32 %s2, 4
  %s19 = int_to_ptr.vmem [resolvable:$true] %s18
  %21 = dma.vmem_to_smem %s19, 16, [#allocation9], [#allocation6]
  %22 = dma.done [#allocation6], 48
  %23 = sfence
  $region1: #{tpu_custom_call.1} parent=0
    #allocation10 [shape = 'u8[512]{0}', space=vmem, size = 0x400, scoped, tag = 'output window, operand 0, single buffered']
    #allocation11 [shape = 's32[1]{0}', space=sflag, size = 0x4, scoped, tag = 'scoped memory for tpu_custom_call.1']
    %24 = vsyncpa [#allocation11], 0
    // Predicated region
    $region2: #{tpu_custom_call.1} parent=1 // pred_check
      _
    $region3: #{tpu_custom_call.1} parent=1 // pred_check_branch
      %26 = sbr.rel (0) target = $region5
    $region4: #{tpu_custom_call.1} parent=1 // pred_region
      _
    $region5: #{tpu_custom_call.1} parent=1 // pred_fallthru
      _
    // Predicated region
    $region6: #{tpu_custom_call.1} parent=1 // pred_check
      _
    $region7: #{tpu_custom_call.1} parent=1 // pred_check_branch
      %28 = sbr.rel (0) target = $region9
    $region8: #{tpu_custom_call.1} parent=1 // pred_region
      _
    $region9: #{tpu_custom_call.1} parent=1 // pred_fallthru
      _
    %s29 = sadd.s32 0, 0
    %s30 = smul.u32 %s29, 8
    %p31 = scmp.eq.s32.totalorder 0, 0
    // Predicated region
    $region10: #{tpu_custom_call.1} parent=1 // pred_check
      %p32 = pneg %p31
    $region11: #{tpu_custom_call.1} parent=1 // pred_check_branch
      %34 = sbr.rel (%p32) target = $region13
    $region12: #{tpu_custom_call.1} parent=1 // pred_region
      %vm35 = vcmask 0
      %36 = vst.msk [vmem:[#allocation5] sm:$0x1] %vm35, 0.0
    $region13: #{tpu_custom_call.1} parent=1 // pred_fallthru
      _
    loop: start=0, step=1, limit=8
    $region14: #{tpu_custom_call.1} parent=1 // loop_pre_header
      _
    $region15: #{tpu_custom_call.1} parent=1 // loop_header
      %s38 = sphi 0, %s42
      %p39 = scmp.ge.s32.totalorder %s38, 8
    $region16: #{tpu_custom_call.1} parent=1 // loop_header_branch
      %41 = sbr.rel (%p39) target = $region20
    $region17: #{tpu_custom_call.1} parent=1 // loop_body
      %s43 = sadd.s32 %s30, %s38
      %p44 = scmp.lt.s32.totalorder %s43, 8
      // Predicated region
      $region21: #{tpu_custom_call.1} parent=17 // pred_check
        %p45 = pneg %p44
      $region22: #{tpu_custom_call.1} parent=17 // pred_check_branch
        %47 = sbr.rel (%p45) target = $region24
      $region23: #{tpu_custom_call.1} parent=17 // pred_region
        %s48 = sld [smem:[#allocation7 + %s43]]
        %s49 = sld [smem:[#allocation8 + %s43]]
        %s50 = scalar_lea.vmem %s3, %s48
        %v51 = vld [vmem:[%s50] sm:$0x1]
        %s52 = scalar_lea.vmem [#allocation2], %s38
        %vm53 = vcmask 253952
        %54 = vst.msk [vmem:[%s52] sm:$0x1] %vm53, %v51
        %s55 = scalar_lea.vmem %s4, %s49
        %v56 = vld [vmem:[%s55] sm:$0x1]
        %s57 = scalar_lea.vmem [#allocation3], %s38
        %58 = vst.msk [vmem:[%s57] sm:$0x1] %vm53, %v56
        %s59 = smul.u32 %s43, 3
        %s60 = sld [smem:[#allocation9 + %s59]]
        %s61 = scalar_lea.vmem %s4, %s60
        %v62 = vld [vmem:[%s61] sm:$0x1]
        %s63 = sadd.s32 %s59, 1
        %s64 = sld [smem:[#allocation9 + %s63]]
        %s65 = scalar_lea.vmem %s4, %s64
        %v66 = vld [vmem:[%s65] sm:$0x1]
        %v67 = vadd.f32 %v62, %v66
        %s68 = sadd.s32 %s59, 2
        %s69 = sld [smem:[#allocation9 + %s68]]
        %s70 = scalar_lea.vmem %s4, %s69
        %v71 = vld [vmem:[%s70] sm:$0x1]
        %v72 = vadd.f32 %v67, %v71
        %s73 = scalar_lea.vmem [#allocation4], %s38
        %74 = vst.msk [vmem:[%s73] sm:$0x1] %vm53, %v72
      $region24: #{tpu_custom_call.1} parent=17 // pred_fallthru
        _
    $region18: #{tpu_custom_call.1} parent=1 // loop_footer
      %s42 = sadd.s32 1, %s38
    $region19: #{tpu_custom_call.1} parent=1 // loop_footer_branch
      %37 = sbr.rel target = $region15
    $region20: #{tpu_custom_call.1} parent=1 // loop_exit
      _
    %v75 = vld [vmem:[#allocation2] sm:$0xff]
    %v76 = vld [vmem:[#allocation3] sm:$0xff]
    %v77 = vmul.f32 %v76, %v75
    %vm78 = vcmask 261120
    %v79 = vsel %vm78, %v77, 0.0
    %80 = vadd.xlane.f32.xlu0 %v79
    %v81 = vpop.xlane.xlu0 %80
    %v82 = vld [vmem:[#allocation4] sm:$0xff]
    %v83 = vmul.f32 %v82, %v75
    %v84 = vsel %vm78, %v83, 0.0
    %85 = vadd.xlane.f32.xlu0 %v84
    %v86 = vpop.xlane.xlu0 %85
    %v87 = vsub.f32 0.0, %v86
    %v88 = vmin.f32 %v81, 0.0
    %v89 = vand.u32 2147483647, %v81
    %v90 = vsub.f32 0.0, %v89
    %v91 = vmul.f32 %v90, 1.442695
    %v92 = vpow.pop %v91
    %v93 = vadd.f32 %v92, 1.0
    %v94 = vlog2.pop %v93
    %v95 = vmul.f32 %v94, 0.6931472
    %v96 = vmul.f32 -0.5, %v92
    %v97 = vadd.f32 %v96, 1.0
    %v98 = vmul.f32 %v97, %v92
    %v99 = vand.u32 2147483647, %v92
    %vm100 = vcmp.lt.f32.partialorder %v99, 0.0004427343
    %v101 = vsel %vm100, %v98, %v95
    %v102 = vsub.f32 %v88, %v101
    %v103 = vmin.f32 %v87, 0.0
    %v104 = vand.u32 2147483647, %v87
    %v105 = vsub.f32 0.0, %v104
    %v106 = vmul.f32 %v105, 1.442695
    %v107 = vpow.pop %v106
    %v108 = vadd.f32 %v107, 1.0
    %v109 = vlog2.pop %v108
    %v110 = vmul.f32 %v109, 0.6931472
    %v111 = vmul.f32 -0.5, %v107
    %v112 = vadd.f32 %v111, 1.0
    %v113 = vmul.f32 %v112, %v107
    %v114 = vand.u32 2147483647, %v107
    %vm115 = vcmp.lt.f32.partialorder %v114, 0.0004427343
    %v116 = vsel %vm115, %v113, %v110
    %v117 = vsub.f32 %v103, %v116
    %v118 = vadd.f32 %v102, %v117
    %v119 = vlaneseq
    %v120 = vshrl.u32 %v119, 7
    %v121 = vstv %s30
    %v122 = vadd.s32 %v121, %v120
    %vm123 = vcmp.lt.s32.totalorder %v122, 8
    %v124 = vsel %vm123, %v118, 0.0
    %v125 = vld [vmem:[#allocation5] sm:$0x1]
    %v126 = vrot.slane %v124, 4
    %v127 = vadd.f32 %v124, %v126
    %v128 = vrot.slane %v127, 2
    %v129 = vadd.f32 %v127, %v128
    %v130 = vrot.slane %v129, 1
    %v131 = vadd.f32 %v129, %v130
    %v132 = vadd.f32 %v125, %v131
    %vm133 = vcmask 0
    %134 = vst.msk [vmem:[#allocation5] sm:$0x1] %vm133, %v132
    // Predicated region
    $region25: #{tpu_custom_call.1} parent=1 // pred_check
      %p135 = pneg %p31
    $region26: #{tpu_custom_call.1} parent=1 // pred_check_branch
      %137 = sbr.rel (%p135) target = $region28
    $region27: #{tpu_custom_call.1} parent=1 // pred_region
      %v138 = vld [vmem:[#allocation5] sm:$0x1]
      %139 = vst.msk [vmem:[#allocation10] sm:$0x1] %vm133, %v138
    $region28: #{tpu_custom_call.1} parent=1 // pred_fallthru
      _
    // Predicated region
    $region29: #{tpu_custom_call.1} parent=1 // pred_check
      _
    $region30: #{tpu_custom_call.1} parent=1 // pred_check_branch
      %141 = sbr.rel (0) target = $region32
    $region31: #{tpu_custom_call.1} parent=1 // pred_region
      %s143 = ssub.s32 16, 16
      %144 = vsyncadd [#allocation11], %s143
      %s146 = sshll.u32 [#allocation10], 4
      %s147 = int_to_ptr.vmem [resolvable:$true] %s146
      %149 = dma.vmem_to_hbm [thread:$0]  %s147, 16, %s5, [#allocation11]
    $region32: #{tpu_custom_call.1} parent=1 // pred_fallthru
      _
    // Predicated region
    $region33: #{tpu_custom_call.1} parent=1 // pred_check
      _
    $region34: #{tpu_custom_call.1} parent=1 // pred_check_branch
      %151 = sbr.rel (0) target = $region36
    $region35: #{tpu_custom_call.1} parent=1 // pred_region
      %152 = dma.done [#allocation11], 16
    $region36: #{tpu_custom_call.1} parent=1 // pred_fallthru
      _
    %153 = vsyncpa [#allocation11], 1

</llo_original>
